<compile_context>
chip_gen: v7x
topology: tpu7x:2x2x1
jax: 0.10.0
libtpu: 0.0.40
codegen_flags: <defaults>
</compile_context>

<pallas_src>
import jax
import jax.numpy as jnp
from jax.experimental import pallas as pl
from jax.experimental.pallas import tpu as pltpu

NEG_SLOPE = 0.01  # nn.LeakyReLU default negative_slope


def _round_up(x, m):
    return ((x + m - 1) // m) * m


def _input_proj_kernel(p_ref, w_ref, b_ref, o_ref):
    # p_ref: (TILE, kdim)   bf16 im2col patches (lane-padded in VMEM only)
    # w_ref: (kdim, C_out)  bf16 weights
    # b_ref: (1, C_out)     f32 bias
    # o_ref: (TILE, C_out)  f32 output tokens
    acc = jnp.dot(p_ref[...], w_ref[...], preferred_element_type=jnp.float32)
    acc = acc + b_ref[...]
    acc = jnp.where(acc >= 0, acc, NEG_SLOPE * acc)
    o_ref[...] = acc.astype(o_ref.dtype)


def _pick_tile(n_tok, tile_tokens, gran=128):
    """Token tile: multiple of `gran`, >=2 grid steps when possible (keeps both
    v7x TensorCores busy), preferring a tile that divides n_tok exactly so
    there is no tail padding / post-kernel slice."""
    if n_tok < 2 * gran:
        return _round_up(max(n_tok, 16), 16)
    cap = min(tile_tokens, n_tok // 2)
    tile = max(gran, (cap // gran) * gran)
    for t in range(tile, gran - 1, -gran):
        if n_tok % t == 0:
            return t
    return tile


def input_proj(x_nchw, weight_hwio, bias, *, tile_tokens=2048):
    """x_nchw: (B, C_in, H, W); weight_hwio: (K, K, C_in, C_out); bias: (C_out,)
    Returns (B, H*W, C_out) == conv(x, pad=K//2) -> LeakyReLU -> flatten(2).T."""
    B, C_in, H, W = x_nchw.shape
    K = weight_hwio.shape[0]
    C_out = weight_hwio.shape[-1]
    pad = K // 2
    kdim = K * K * C_in
    n_tok = B * H * W

    # --- im2col in the wrapper, in bf16 (tap order (kh, kw, C_in) matches
    #     weight_hwio.reshape(kdim, C_out)).
    x_nhwc = jnp.transpose(x_nchw, (0, 2, 3, 1)).astype(jnp.bfloat16)
    x_padded = jnp.pad(x_nhwc, ((0, 0), (pad, pad), (pad, pad), (0, 0)))
    taps = [x_padded[:, kh:kh + H, kw:kw + W, :]
            for kh in range(K) for kw in range(K)]
    patches = jnp.concatenate(taps, axis=-1).reshape(n_tok, kdim)

    tile = _pick_tile(n_tok, tile_tokens)
    n_pad = _round_up(n_tok, tile)
    if n_pad != n_tok:
        # padded rows hold zeros -> LeakyReLU(bias); sliced off below.
        patches = jnp.pad(patches, ((0, n_pad - n_tok), (0, 0)))

    w2d = weight_hwio.reshape(kdim, C_out).astype(jnp.bfloat16)
    b2d = bias.astype(jnp.float32).reshape(1, C_out)

    grid = (n_pad // tile,)
    flops = 2 * n_tok * kdim * C_out
    bytes_accessed = (patches.size * 2 + w2d.size * 2 + b2d.size * 4
                      + n_pad * C_out * 4)

    out = pl.pallas_call(
        _input_proj_kernel,
        out_shape=jax.ShapeDtypeStruct((n_pad, C_out), jnp.float32),
        grid=grid,
        in_specs=[
            pl.BlockSpec((tile, kdim), lambda i: (i, 0)),     # full-extent kdim
            pl.BlockSpec((kdim, C_out), lambda i: (0, 0)),    # whole weight
            pl.BlockSpec((1, C_out), lambda i: (0, 0)),       # whole bias
        ],
        out_specs=pl.BlockSpec((tile, C_out), lambda i: (i, 0)),  # full-extent C_out
        compiler_params=pltpu.CompilerParams(
            dimension_semantics=("parallel",)),
        cost_estimate=pl.CostEstimate(
            flops=flops, transcendentals=0, bytes_accessed=bytes_accessed),
    )(patches, w2d, b2d)

    if n_pad != n_tok:
        out = out[:n_tok]
    return out.reshape(B, H * W, C_out).astype(x_nchw.dtype)


def _reference(x_nchw, weight_hwio, bias):
    # Pure-JAX f32 reference: conv + LeakyReLU + flatten(2).transpose(1,2)
    out = jax.lax.conv_general_dilated(
        x_nchw.astype(jnp.float32),
        jnp.transpose(weight_hwio, (3, 2, 0, 1)),  # HWIO -> OIHW
        window_strides=(1, 1),
        padding="SAME",
        dimension_numbers=("NCHW", "OIHW", "NCHW"),
    )
    out = out + bias[None, :, None, None]
    out = jnp.where(out >= 0, out, NEG_SLOPE * out)
    B, C, H, W = out.shape
    return jnp.transpose(out.reshape(B, C, H * W), (0, 2, 1))


if __name__ == "__main__":
    # Small shapes consistent with the module's forward.
    B, C_in, H, W = 2, 4, 16, 16
    C_out, K = 32, 3

    key = jax.random.PRNGKey(0)
    kx, kw, kb = jax.random.split(key, 3)
    x = jax.random.normal(kx, (B, C_in, H, W), dtype=jnp.float32)
    fan_in = C_in * K * K
    weight = jax.random.normal(kw, (K, K, C_in, C_out), dtype=jnp.float32) / jnp.sqrt(fan_in)
    bias = jax.random.normal(kb, (C_out,), dtype=jnp.float32) * 0.01

    out = jax.block_until_ready(input_proj(x, weight, bias))
    ref = jax.block_until_ready(_reference(x, weight, bias))

    assert out.shape == (B, H * W, C_out), out.shape
    # bf16 MXU inputs with f32 accumulation -> slightly relaxed tolerance.
    assert jnp.allclose(out, ref, rtol=2e-2, atol=2e-2), float(jnp.max(jnp.abs(out - ref)))

    print("KERNEL_OK")
</pallas_src>

<mosaic_0001>
module attributes {stable_mosaic.version = 11 : i64} {
  func.func @_input_proj_kernel(%arg0: i32, %arg1: memref<256x36xbf16, #tpu.memory_space<vmem>>, %arg2: memref<36x32xbf16, #tpu.memory_space<vmem>>, %arg3: memref<1x32xf32, #tpu.memory_space<vmem>>, %arg4: memref<256x32xf32, #tpu.memory_space<vmem>>) attributes {dimension_semantics = [#tpu.dimension_semantics<parallel>], iteration_bounds = array<i64: 2>, scalar_prefetch = 0 : i64, scratch_operands = 0 : i64, tpu.core_type = #tpu.core_type<tc>, window_params = [{transform_indices = @transform_0, window_bounds = array<i64: 256, 36>}, {pipeline_mode = #tpu.pipeline_mode<synchronous>, transform_indices = @transform_1, window_bounds = array<i64: 36, 32>}, {pipeline_mode = #tpu.pipeline_mode<synchronous>, transform_indices = @transform_2, window_bounds = array<i64: 1, 32>}, {transform_indices = @transform_3, window_bounds = array<i64: 256, 32>}]} {
    %c0 = arith.constant 0 : index
    %c0_0 = arith.constant 0 : index
    %0 = vector.load %arg1[%c0, %c0_0] : memref<256x36xbf16, #tpu.memory_space<vmem>>, vector<256x36xbf16>
    %c0_1 = arith.constant 0 : index
    %c0_2 = arith.constant 0 : index
    %1 = vector.load %arg2[%c0_1, %c0_2] : memref<36x32xbf16, #tpu.memory_space<vmem>>, vector<36x32xbf16>
    %cst = arith.constant dense<0.000000e+00> : vector<256x32xf32>
    %2 = tpu.matmul %0, %1, %cst {dimension_numbers = #tpu.dot_dimension_numbers<[1], [0], [0], [1], [0, 0, 1, 1], [], []>} : vector<256x36xbf16>, vector<36x32xbf16>, vector<256x32xf32> -> vector<256x32xf32>
    %c0_3 = arith.constant 0 : index
    %c0_4 = arith.constant 0 : index
    %3 = vector.load %arg3[%c0_3, %c0_4] : memref<1x32xf32, #tpu.memory_space<vmem>>, vector<1x32xf32>
    %4 = vector.broadcast %3 : vector<1x32xf32> to vector<256x32xf32>
    %5 = arith.addf %2, %4 : vector<256x32xf32>
    %cst_5 = arith.constant 0.000000e+00 : f32
    %6 = vector.broadcast %cst_5 : f32 to vector<256x32xf32>
    %7 = arith.cmpf oge, %5, %6 : vector<256x32xf32>
    %cst_6 = arith.constant 0.00999999977 : f32
    %8 = vector.broadcast %cst_6 : f32 to vector<256x32xf32>
    %9 = arith.mulf %8, %5 : vector<256x32xf32>
    %10 = arith.select %7, %5, %9 : vector<256x32xi1>, vector<256x32xf32>
    %c0_7 = arith.constant 0 : index
    %c0_8 = arith.constant 0 : index
    %11 = vector.load %arg4[%c0_7, %c0_8] : memref<256x32xf32, #tpu.memory_space<vmem>>, vector<256x32xf32>
    tpu.vector_store %arg4[%c0_7, %c0_8], %10 {strides = array<i32>} : memref<256x32xf32, #tpu.memory_space<vmem>>, vector<256x32xf32>,
    return
  }
  func.func @transform_0(%arg0: i32) -> (i32, i32) {
    %c0_i32 = arith.constant 0 : i32
    %c0_i32_0 = arith.constant 0 : i32
    return %arg0, %c0_i32 : i32, i32
  }
  func.func @transform_1(%arg0: i32) -> (i32, i32) {
    %c0_i32 = arith.constant 0 : i32
    %c0_i32_0 = arith.constant 0 : i32
    %c0_i32_1 = arith.constant 0 : i32
    return %c0_i32, %c0_i32_0 : i32, i32
  }
  func.func @transform_2(%arg0: i32) -> (i32, i32) {
    %c0_i32 = arith.constant 0 : i32
    %c0_i32_0 = arith.constant 0 : i32
    %c0_i32_1 = arith.constant 0 : i32
    return %c0_i32, %c0_i32_0 : i32, i32
  }
  func.func @transform_3(%arg0: i32) -> (i32, i32) {
    %c0_i32 = arith.constant 0 : i32
    %c0_i32_0 = arith.constant 0 : i32
    return %arg0, %c0_i32 : i32, i32
  }
}

</mosaic_0001>

<llo_original>
// kernel: tpu_custom_call.1
$region0: #{tpu_custom_call.1}
  #allocation0 [shape = 'u32[]', space=smem, size = 0x4, offset = 0x4, fixed_abs, tag = 'smem constant byte address 0x4 - core index']
  #allocation1 [shape = 'u32[144,128]{1,0:T(1,128)}', space=vmem, size = 0x12000, scoped, tag = 'internal scratch']
  %s0 = inlined_call_operand.vmem [shape: bf16[512,36], index: 0, kind: input, shape index: {}]
  %s1 = inlined_call_operand.vmem [shape: bf16[36,32], index: 1, kind: input, shape index: {}]
  %s2 = inlined_call_operand.vmem [shape: f32[1,32], index: 2, kind: input, shape index: {}]
  %s3 = inlined_call_operand.vmem [shape: f32[512,32], index: 3, kind: output, shape index: {}]
  %s4 = sld [smem:[#allocation0]]
  $region45: #{tpu_custom_call.1} parent=0
    _
  %s6 = ssub.s32 1, %s4
  %s7 = scalar_select 0, %s6, %s4
  loop: start=0, step=1, limit=4
  $region2: #{tpu_custom_call.1} parent=0 // loop_pre_header
    _
  $region3: #{tpu_custom_call.1} parent=0 // loop_header
    %s9 = sphi 0, %s13
    %p10 = scmp.ge.s32.totalorder %s9, 4
    %s19 = sphi 0, %s21
    %s22 = sphi 0, %s19
    %s23 = sphi 0, %s22
    %s39 = sphi 0, %s23
    %s43 = sphi 0, %s43
    %s45 = sphi 0, %s43
    %s46 = sphi 0, %s45
    %s60 = sphi 0, %s46
    %s64 = sphi 0, %s64
    %s66 = sphi 0, %s64
    %s67 = sphi 0, %s66
    %s81 = sphi 0, %s67
    %s87 = sphi 0, %s89
    %s90 = sphi 0, %s87
    %s91 = sphi 0, %s90
    %s107 = sphi 0, %s91
  $region4: #{tpu_custom_call.1} parent=0 // loop_header_branch
    %12 = sbr.rel (%p10) target = $region8
  $region5: #{tpu_custom_call.1} parent=0 // loop_body
    %s14 = ssub.s32 %s9, 1
    %s15 = ssub.s32 %s9, 2
    %s16 = sadd.s32 %s9, 1
    %s17 = ssub.s32 %s9, %s16
    %p18 = scmp.eq.s32.totalorder %s17, 0
    %s20 = sadd.s32 %s19, 1
    %s21 = scalar_select %p18, %s19, %s20
    %p24 = pneg %p18
    %p25 = scmp.eq.s32.totalorder %s9, 1
    %p26 = por %p24, %p25
    %p27 = scmp.ne.s32.totalorder %s19, %s22
    %p28 = scmp.eq.s32.totalorder %s9, 0
    %p29 = por %p27, %p28
    %p30 = scmp.ne.s32.totalorder %s19, %s22
    %p31 = scmp.eq.s32.totalorder %s14, 1
    %p32 = por %p30, %p31
    %p33 = scmp.ne.s32.totalorder %s22, %s23
    %p34 = scmp.eq.s32.totalorder %s14, 0
    %p35 = por %p33, %p34
    %p36 = scmp.ne.s32.totalorder %s22, %s23
    %p37 = scmp.eq.s32.totalorder %s15, 1
    %p38 = por %p36, %p37
    %p40 = scmp.ne.s32.totalorder %s23, %s39
    %p41 = scmp.eq.s32.totalorder %s15, 0
    %p42 = por %p40, %p41
    %s44 = sadd.s32 %s43, 1
    %p47 = scmp.eq.s32.totalorder %s9, 1
    %p48 = scmp.ne.s32.totalorder %s43, %s45
    %p49 = scmp.eq.s32.totalorder %s9, 0
    %p50 = por %p48, %p49
    %p51 = scmp.ne.s32.totalorder %s43, %s45
    %p52 = scmp.eq.s32.totalorder %s14, 1
    %p53 = por %p51, %p52
    %p54 = scmp.ne.s32.totalorder %s45, %s46
    %p55 = scmp.eq.s32.totalorder %s14, 0
    %p56 = por %p54, %p55
    %p57 = scmp.ne.s32.totalorder %s45, %s46
    %p58 = scmp.eq.s32.totalorder %s15, 1
    %p59 = por %p57, %p58
    %p61 = scmp.ne.s32.totalorder %s46, %s60
    %p62 = scmp.eq.s32.totalorder %s15, 0
    %p63 = por %p61, %p62
    %s65 = sadd.s32 %s64, 1
    %p68 = scmp.eq.s32.totalorder %s9, 1
    %p69 = scmp.ne.s32.totalorder %s64, %s66
    %p70 = scmp.eq.s32.totalorder %s9, 0
    %p71 = por %p69, %p70
    %p72 = scmp.ne.s32.totalorder %s64, %s66
    %p73 = scmp.eq.s32.totalorder %s14, 1
    %p74 = por %p72, %p73
    %p75 = scmp.ne.s32.totalorder %s66, %s67
    %p76 = scmp.eq.s32.totalorder %s14, 0
    %p77 = por %p75, %p76
    %p78 = scmp.ne.s32.totalorder %s66, %s67
    %p79 = scmp.eq.s32.totalorder %s15, 1
    %p80 = por %p78, %p79
    %p82 = scmp.ne.s32.totalorder %s67, %s81
    %p83 = scmp.eq.s32.totalorder %s15, 0
    %p84 = por %p82, %p83
    %s85 = ssub.s32 %s9, %s16
    %p86 = scmp.eq.s32.totalorder %s85, 0
    %s88 = sadd.s32 %s87, 1
    %s89 = scalar_select %p86, %s87, %s88
    %p92 = pneg %p86
    %p93 = scmp.eq.s32.totalorder %s9, 1
    %p94 = por %p92, %p93
    %p95 = scmp.ne.s32.totalorder %s87, %s90
    %p96 = scmp.eq.s32.totalorder %s9, 0
    %p97 = por %p95, %p96
    %p98 = scmp.ne.s32.totalorder %s87, %s90
    %p99 = scmp.eq.s32.totalorder %s14, 1
    %p100 = por %p98, %p99
    %p101 = scmp.ne.s32.totalorder %s90, %s91
    %p102 = scmp.eq.s32.totalorder %s14, 0
    %p103 = por %p101, %p102
    %p104 = scmp.ne.s32.totalorder %s90, %s91
    %p105 = scmp.eq.s32.totalorder %s15, 1
    %p106 = por %p104, %p105
    %p108 = scmp.ne.s32.totalorder %s91, %s107
    %p109 = scmp.eq.s32.totalorder %s15, 0
    %p110 = por %p108, %p109
    %p111 = scmp.le.s32.totalorder 1, %s9
    %p112 = scmp.lt.s32.totalorder %s9, 3
    %p113 = pnand %p111, %p112
    %p114 = pneg %p113
    // Predicated region
    $region9: #{tpu_custom_call.1} parent=5 // pred_check
      _
    $region10: #{tpu_custom_call.1} parent=5 // pred_check_branch
      %116 = sbr.rel (%p113) target = $region12
    $region11: #{tpu_custom_call.1} parent=5 // pred_region
      %s117 = ssub.s32 %s9, 1
      // Predicated region
      $region13: #{tpu_custom_call.1} parent=11 // pred_check
        %p118 = pneg %p56
      $region14: #{tpu_custom_call.1} parent=11 // pred_check_branch
        %120 = sbr.rel (%p118) target = $region16
      $region15: #{tpu_custom_call.1} parent=11 // pred_region
        _
      $region16: #{tpu_custom_call.1} parent=11 // pred_fallthru
        _
      // Predicated region
      $region17: #{tpu_custom_call.1} parent=11 // pred_check
        %p121 = pneg %p77
      $region18: #{tpu_custom_call.1} parent=11 // pred_check_branch
        %123 = sbr.rel (%p121) target = $region20
      $region19: #{tpu_custom_call.1} parent=11 // pred_region
        _
      $region20: #{tpu_custom_call.1} parent=11 // pred_fallthru
        _
    $region12: #{tpu_custom_call.1} parent=5 // pred_fallthru
      _
    %p124 = scmp.lt.s32.totalorder %s9, 2
    // Predicated region
    $region21: #{tpu_custom_call.1} parent=5 // pred_check
      %p125 = pneg %p124
    $region22: #{tpu_custom_call.1} parent=5 // pred_check_branch
      %127 = sbr.rel (%p125) target = $region24
    $region23: #{tpu_custom_call.1} parent=5 // pred_region
      // Predicated region
      $region25: #{tpu_custom_call.1} parent=23 // pred_check
        %p128 = pneg %p29
      $region26: #{tpu_custom_call.1} parent=23 // pred_check_branch
        %130 = sbr.rel (%p128) target = $region28
      $region27: #{tpu_custom_call.1} parent=23 // pred_region
        %s131 = smul.u32 32, %s9
        %p132 = scmp.lt.s32.totalorder %s131, 63
        %s133 = scalar_select %p132, %s131, 63
        %s134 = smul.addr %s133, 4
        %s135 = scalar_lea.vmem %s0, %s134
        %s136 = smul.u32 32, %s9
      $region28: #{tpu_custom_call.1} parent=23 // pred_fallthru
        _
    $region24: #{tpu_custom_call.1} parent=5 // pred_fallthru
      _
    %p137 = scmp.le.s32.totalorder 1, %s9
    %p138 = scmp.lt.s32.totalorder %s9, 3
    %p139 = pnand %p137, %p138
    %p140 = pneg %p139
    // Predicated region
    $region29: #{tpu_custom_call.1} parent=5 // pred_check
      _
    $region30: #{tpu_custom_call.1} parent=5 // pred_check_branch
      %142 = sbr.rel (%p139) target = $region32
    $region31: #{tpu_custom_call.1} parent=5 // pred_region
      %s143 = ssub.s32 %s9, 1
      %s144 = smul.u32 32, %s14
      %p145 = scmp.lt.s32.totalorder %s144, 63
      %s146 = scalar_select %p145, %s144, 63
      %s147 = smul.addr %s146, 4
      %s148 = scalar_lea.vmem %s0, %s147
      %p149 = pneg %p35
      %p150 = pneg %p32
      %p151 = pneg %p56
      %p152 = pneg %p53
      %p153 = pneg %p77
      %p154 = pneg %p74
      %p155 = pneg %p103
      %p156 = pneg %p100
      %s157 = smul.u32 32, %s14
      %p158 = scmp.lt.s32.totalorder %s157, 63
      %s159 = scalar_select %p158, %s157, 63
      %s160 = smul.addr %s159, 8
      %s161 = scalar_lea.vmem %s3, %s160
      %s162 = smul.u32 32, %s14
      %p163 = scmp.lt.s32.totalorder %s162, 63
      %s164 = scalar_select %p163, %s162, 63
      %s165 = smul.addr %s164, 4
      %s166 = scalar_lea.vmem %s0, %s165
      %s167 = smul.u32 32, %s14
      %s168 = smul.u32 32, %s14
      %p169 = scmp.lt.s32.totalorder %s168, 63
      %s170 = scalar_select %p169, %s168, 63
      %s171 = smul.addr %s170, 8
      %s172 = scalar_lea.vmem %s3, %s171
      %s173 = smul.u32 32, %s14
      %v175 = vld [vmem:[%s166] sm:$0xf]
      %v176 = vld [vmem:[%s166 + $0x4] sm:$0xf]
      %v177 = vld [vmem:[%s166 + $0x8] sm:$0xf]
      %v178 = vld [vmem:[%s166 + $0xc] sm:$0xf]
      %v179 = vld [vmem:[%s166 + $0x10] sm:$0xf]
      %v180 = vld [vmem:[%s166 + $0x14] sm:$0xf]
      %v181 = vld [vmem:[%s166 + $0x18] sm:$0xf]
      %v182 = vld [vmem:[%s166 + $0x1c] sm:$0xf]
      %v183 = vld [vmem:[%s166 + $0x20] sm:$0xf]
      %v184 = vld [vmem:[%s166 + $0x24] sm:$0xf]
      %v185 = vld [vmem:[%s166 + $0x28] sm:$0xf]
      %v186 = vld [vmem:[%s166 + $0x2c] sm:$0xf]
      %v187 = vld [vmem:[%s166 + $0x30] sm:$0xf]
      %v188 = vld [vmem:[%s166 + $0x34] sm:$0xf]
      %v189 = vld [vmem:[%s166 + $0x38] sm:$0xf]
      %v190 = vld [vmem:[%s166 + $0x3c] sm:$0xf]
      %v191 = vld [vmem:[%s166 + $0x40] sm:$0xf]
      %v192 = vld [vmem:[%s166 + $0x44] sm:$0xf]
      %v193 = vld [vmem:[%s166 + $0x48] sm:$0xf]
      %v194 = vld [vmem:[%s166 + $0x4c] sm:$0xf]
      %v195 = vld [vmem:[%s166 + $0x50] sm:$0xf]
      %v196 = vld [vmem:[%s166 + $0x54] sm:$0xf]
      %v197 = vld [vmem:[%s166 + $0x58] sm:$0xf]
      %v198 = vld [vmem:[%s166 + $0x5c] sm:$0xf]
      %v199 = vld [vmem:[%s166 + $0x60] sm:$0xf]
      %v200 = vld [vmem:[%s166 + $0x64] sm:$0xf]
      %v201 = vld [vmem:[%s166 + $0x68] sm:$0xf]
      %v202 = vld [vmem:[%s166 + $0x6c] sm:$0xf]
      %v203 = vld [vmem:[%s166 + $0x70] sm:$0xf]
      %v204 = vld [vmem:[%s166 + $0x74] sm:$0xf]
      %v205 = vld [vmem:[%s166 + $0x78] sm:$0xf]
      %v206 = vld [vmem:[%s166 + $0x7c] sm:$0xf]
      %v207 = vld [vmem:[%s1] sm:$0xf]
      %v208 = vld [vmem:[%s1 + $0x4] sm:$0xf]
      %v209 = vld [vmem:[%s1 + $0x8] sm:$0xf]
      %v210 = vld [vmem:[%s1 + $0xc] sm:$0xf]
      %v211 = vld [vmem:[%s1 + $0x10] sm:$0x3]
      %v212 = vld [vmem:[%s2] sm:$0x1]
      %v214 = vlaneseq
      %v215 = vshrl.u32 %v214, 7
      %v216 = vsub.s32 0, %v215
      %v217 = vrot.slane %v212, %v216
      %v251 = vunpack.c.l.b16 %v175
      %v252 = vunpack.c.l.b16 %v176
      %v253 = vunpack.c.l.b16 %v177
      %v254 = vunpack.c.l.b16 %v178
      %v255 = vunpack.c.l.b16 %v179
      %v256 = vunpack.c.l.b16 %v180
      %v257 = vunpack.c.l.b16 %v181
      %v258 = vunpack.c.l.b16 %v182
      %v259 = vunpack.c.l.b16 %v183
      %v260 = vunpack.c.l.b16 %v184
      %v261 = vunpack.c.l.b16 %v185
      %v262 = vunpack.c.l.b16 %v186
      %v263 = vunpack.c.l.b16 %v187
      %v264 = vunpack.c.l.b16 %v188
      %v265 = vunpack.c.l.b16 %v189
      %v266 = vunpack.c.l.b16 %v190
      %v267 = vunpack.c.l.b16 %v191
      %v268 = vunpack.c.l.b16 %v192
      %v269 = vunpack.c.l.b16 %v193
      %v270 = vunpack.c.l.b16 %v194
      %v271 = vunpack.c.l.b16 %v195
      %v272 = vunpack.c.l.b16 %v196
      %v273 = vunpack.c.l.b16 %v197
      %v274 = vunpack.c.l.b16 %v198
      %v275 = vunpack.c.l.b16 %v199
      %v276 = vunpack.c.l.b16 %v200
      %v277 = vunpack.c.l.b16 %v201
      %v278 = vunpack.c.l.b16 %v202
      %v279 = vunpack.c.l.b16 %v203
      %v280 = vunpack.c.l.b16 %v204
      %v281 = vunpack.c.l.b16 %v205
      %v282 = vunpack.c.l.b16 %v206
      %v283 = vpack.c.b16 %v252, %v251
      %v284 = vpack.c.b16 %v254, %v253
      %v285 = vpack.c.b16 %v256, %v255
      %v286 = vpack.c.b16 %v258, %v257
      %v287 = vpack.c.b16 %v260, %v259
      %v288 = vpack.c.b16 %v262, %v261
      %v289 = vpack.c.b16 %v264, %v263
      %v290 = vpack.c.b16 %v266, %v265
      %v291 = vpack.c.b16 %v268, %v267
      %v292 = vpack.c.b16 %v270, %v269
      %v293 = vpack.c.b16 %v272, %v271
      %v294 = vpack.c.b16 %v274, %v273
      %v295 = vpack.c.b16 %v276, %v275
      %v296 = vpack.c.b16 %v278, %v277
      %v297 = vpack.c.b16 %v280, %v279
      %v298 = vpack.c.b16 %v282, %v281
      %v304 = vunpack.c.l.b16 %v207
      %v305 = vunpack.c.l.b16 %v208
      %v306 = vunpack.c.l.b16 %v209
      %v307 = vunpack.c.l.b16 %v210
      %v308 = vunpack.c.l.b16 %v211
      %v309 = vpack.c.b16 %v305, %v304
      %v310 = vpack.c.b16 %v307, %v306
      %v311 = vpack.c.b16 %v308, %v308
      %vm314 = vcmask 293888
      %v316 = vsel %vm314, %v283, 0
      %v319 = vsel %vm314, %v284, 0
      %v322 = vsel %vm314, %v285, 0
      %v325 = vsel %vm314, %v286, 0
      %v328 = vsel %vm314, %v287, 0
      %v331 = vsel %vm314, %v288, 0
      %v334 = vsel %vm314, %v289, 0
      %v337 = vsel %vm314, %v290, 0
      %v340 = vsel %vm314, %v291, 0
      %v343 = vsel %vm314, %v292, 0
      %v346 = vsel %vm314, %v293, 0
      %v349 = vsel %vm314, %v294, 0
      %v352 = vsel %vm314, %v295, 0
      %v355 = vsel %vm314, %v296, 0
      %v358 = vsel %vm314, %v297, 0
      %v361 = vsel %vm314, %v298, 0
      %vm363 = vcmask 1041408
      %v365 = vsel %vm363, %v311, 0
      %367 = vmatprep.subr.bf16.mxu0 0
      %368 = vmatpush1.bf16.msra.mxu0 %v309
      %369 = vmatprep.subr.bf16.mxu0 0
      %370 = vmatpush1.bf16.msra.mxu0 %v310
      %371 = vmatprep.subr.bf16.mxu0 0
      %372 = vmatpush1.bf16.msra.mxu0 %v365
      %373 = vmatprep.subr.bf16.mxu0 0
      %374 = vmatpush1.bf16.msra.mxu0 0
      %375 = vmatprep.subr.bf16.mxu0 0
      %376 = vmatpush1.bf16.msra.mxu0 0
      %377 = vmatprep.subr.bf16.mxu0 0
      %378 = vmatpush1.bf16.msra.mxu0 0
      %379 = vmatprep.subr.bf16.mxu0 0
      %380 = vmatpush1.bf16.msra.mxu0 0
      %381 = vmatprep.subr.bf16.mxu0 0
      %382 = vmatpush1.bf16.msra.mxu0 0
      %383 = vmatprep.subr.bf16.mxu0 0
      %384 = vmatpush1.bf16.msra.mxu0 0
      %385 = vmatprep.subr.bf16.mxu0 0
      %386 = vmatpush1.bf16.msra.mxu0 0
      %387 = vmatprep.subr.bf16.mxu0 0
      %388 = vmatpush1.bf16.msra.mxu0 0
      %389 = vmatprep.subr.bf16.mxu0 0
      %390 = vmatpush1.bf16.msra.mxu0 0
      %391 = vmatprep.subr.bf16.mxu0 0
      %392 = vmatpush1.bf16.msra.mxu0 0
      %393 = vmatprep.subr.bf16.mxu0 0
      %394 = vmatpush1.bf16.msra.mxu0 0
      %395 = vmatprep.subr.bf16.mxu0 0
      %396 = vmatpush1.bf16.msra.mxu0 0
      %397 = vmatprep.subr.bf16.mxu0 0
      %398 = vmatpush1.bf16.msra.mxu0 0
      %399 = vmatprep.mubr.bf16.mxu0 0
      %400 = vmatmul.mubr.bf16.gmra.mrb[0].mxu0 %v316
      %v401 = vpop.f32.mrb[0].mxu0
      %v402 = vadd.f32 %v217, %v401
      %v403 = vpop.f32.mrb[0].mxu0
      %v404 = vpop.f32.mrb[0].mxu0
      %v405 = vadd.f32 %v217, %v404
      %v406 = vpop.f32.mrb[0].mxu0
      %407 = vmatprep.mubr.bf16.mxu0 0
      %408 = vmatmul.mubr.bf16.gmra.mrb[0].mxu0 %v319
      %v409 = vpop.f32.mrb[0].mxu0
      %v410 = vadd.f32 %v217, %v409
      %v411 = vpop.f32.mrb[0].mxu0
      %v412 = vpop.f32.mrb[0].mxu0
      %v413 = vadd.f32 %v217, %v412
      %v414 = vpop.f32.mrb[0].mxu0
      %415 = vmatprep.mubr.bf16.mxu0 0
      %416 = vmatmul.mubr.bf16.gmra.mrb[0].mxu0 %v322
      %v417 = vpop.f32.mrb[0].mxu0
      %v418 = vadd.f32 %v217, %v417
      %v419 = vpop.f32.mrb[0].mxu0
      %v420 = vpop.f32.mrb[0].mxu0
      %v421 = vadd.f32 %v217, %v420
      %v422 = vpop.f32.mrb[0].mxu0
      %423 = vmatprep.mubr.bf16.mxu0 0
      %424 = vmatmul.mubr.bf16.gmra.mrb[0].mxu0 %v325
      %v425 = vpop.f32.mrb[0].mxu0
      %v426 = vadd.f32 %v217, %v425
      %v427 = vpop.f32.mrb[0].mxu0
      %v428 = vpop.f32.mrb[0].mxu0
      %v429 = vadd.f32 %v217, %v428
      %v430 = vpop.f32.mrb[0].mxu0
      %431 = vmatprep.mubr.bf16.mxu0 0
      %432 = vmatmul.mubr.bf16.gmra.mrb[0].mxu0 %v328
      %v433 = vpop.f32.mrb[0].mxu0
      %v434 = vadd.f32 %v217, %v433
      %v435 = vpop.f32.mrb[0].mxu0
      %v436 = vpop.f32.mrb[0].mxu0
      %v437 = vadd.f32 %v217, %v436
      %v438 = vpop.f32.mrb[0].mxu0
      %439 = vmatprep.mubr.bf16.mxu0 0
      %440 = vmatmul.mubr.bf16.gmra.mrb[0].mxu0 %v331
      %v441 = vpop.f32.mrb[0].mxu0
      %v442 = vadd.f32 %v217, %v441
      %v443 = vpop.f32.mrb[0].mxu0
      %v444 = vpop.f32.mrb[0].mxu0
      %v445 = vadd.f32 %v217, %v444
      %v446 = vpop.f32.mrb[0].mxu0
      %447 = vmatprep.mubr.bf16.mxu0 0
      %448 = vmatmul.mubr.bf16.gmra.mrb[0].mxu0 %v334
      %v449 = vpop.f32.mrb[0].mxu0
      %v450 = vadd.f32 %v217, %v449
      %v451 = vpop.f32.mrb[0].mxu0
      %v452 = vpop.f32.mrb[0].mxu0
      %v453 = vadd.f32 %v217, %v452
      %v454 = vpop.f32.mrb[0].mxu0
      %455 = vmatprep.mubr.bf16.mxu0 0
      %456 = vmatmul.mubr.bf16.gmra.mrb[0].mxu0 %v337
      %v457 = vpop.f32.mrb[0].mxu0
      %v458 = vadd.f32 %v217, %v457
      %v459 = vpop.f32.mrb[0].mxu0
      %v460 = vpop.f32.mrb[0].mxu0
      %v461 = vadd.f32 %v217, %v460
      %v462 = vpop.f32.mrb[0].mxu0
      %463 = vmatprep.mubr.bf16.mxu0 0
      %464 = vmatmul.mubr.bf16.gmra.mrb[0].mxu0 %v340
      %v465 = vpop.f32.mrb[0].mxu0
      %v466 = vadd.f32 %v217, %v465
      %v467 = vpop.f32.mrb[0].mxu0
      %v468 = vpop.f32.mrb[0].mxu0
      %v469 = vadd.f32 %v217, %v468
      %v470 = vpop.f32.mrb[0].mxu0
      %471 = vmatprep.mubr.bf16.mxu0 0
      %472 = vmatmul.mubr.bf16.gmra.mrb[0].mxu0 %v343
      %v473 = vpop.f32.mrb[0].mxu0
      %v474 = vadd.f32 %v217, %v473
      %v475 = vpop.f32.mrb[0].mxu0
      %v476 = vpop.f32.mrb[0].mxu0
      %v477 = vadd.f32 %v217, %v476
      %v478 = vpop.f32.mrb[0].mxu0
      %479 = vmatprep.mubr.bf16.mxu0 0
      %480 = vmatmul.mubr.bf16.gmra.mrb[0].mxu0 %v346
      %v481 = vpop.f32.mrb[0].mxu0
      %v482 = vadd.f32 %v217, %v481
      %v483 = vpop.f32.mrb[0].mxu0
      %v484 = vpop.f32.mrb[0].mxu0
      %v485 = vadd.f32 %v217, %v484
      %v486 = vpop.f32.mrb[0].mxu0
      %487 = vmatprep.mubr.bf16.mxu0 0
      %488 = vmatmul.mubr.bf16.gmra.mrb[0].mxu0 %v349
      %v489 = vpop.f32.mrb[0].mxu0
      %v490 = vadd.f32 %v217, %v489
      %v491 = vpop.f32.mrb[0].mxu0
      %v492 = vpop.f32.mrb[0].mxu0
      %v493 = vadd.f32 %v217, %v492
      %v494 = vpop.f32.mrb[0].mxu0
      %495 = vmatprep.mubr.bf16.mxu0 0
      %496 = vmatmul.mubr.bf16.gmra.mrb[0].mxu0 %v352
      %v497 = vpop.f32.mrb[0].mxu0
      %v498 = vadd.f32 %v217, %v497
      %v499 = vpop.f32.mrb[0].mxu0
      %v500 = vpop.f32.mrb[0].mxu0
      %v501 = vadd.f32 %v217, %v500
      %v502 = vpop.f32.mrb[0].mxu0
      %503 = vmatprep.mubr.bf16.mxu0 0
      %504 = vmatmul.mubr.bf16.gmra.mrb[0].mxu0 %v355
      %v505 = vpop.f32.mrb[0].mxu0
      %v506 = vadd.f32 %v217, %v505
      %v507 = vpop.f32.mrb[0].mxu0
      %v508 = vpop.f32.mrb[0].mxu0
      %v509 = vadd.f32 %v217, %v508
      %v510 = vpop.f32.mrb[0].mxu0
      %511 = vmatprep.mubr.bf16.mxu0 0
      %512 = vmatmul.mubr.bf16.gmra.mrb[0].mxu0 %v358
      %v513 = vpop.f32.mrb[0].mxu0
      %v514 = vadd.f32 %v217, %v513
      %v515 = vpop.f32.mrb[0].mxu0
      %v516 = vpop.f32.mrb[0].mxu0
      %v517 = vadd.f32 %v217, %v516
      %v518 = vpop.f32.mrb[0].mxu0
      %519 = vmatprep.mubr.bf16.mxu0 0
      %520 = vmatmul.mubr.bf16.gmra.mrb[0].mxu0 %v361
      %v521 = vpop.f32.mrb[0].mxu0
      %v522 = vadd.f32 %v217, %v521
      %v523 = vpop.f32.mrb[0].mxu0
      %v524 = vpop.f32.mrb[0].mxu0
      %v525 = vadd.f32 %v217, %v524
      %v526 = vpop.f32.mrb[0].mxu0
      %527 = vdwg.mxu0
      %vm528 = vcmp.ge.f32.partialorder %v402, 0.0
      %vm529 = vcmp.ge.f32.partialorder %v405, 0.0
      %vm530 = vcmp.ge.f32.partialorder %v410, 0.0
      %vm531 = vcmp.ge.f32.partialorder %v413, 0.0
      %vm532 = vcmp.ge.f32.partialorder %v418, 0.0
      %vm533 = vcmp.ge.f32.partialorder %v421, 0.0
      %vm534 = vcmp.ge.f32.partialorder %v426, 0.0
      %vm535 = vcmp.ge.f32.partialorder %v429, 0.0
      %vm536 = vcmp.ge.f32.partialorder %v434, 0.0
      %vm537 = vcmp.ge.f32.partialorder %v437, 0.0
      %vm538 = vcmp.ge.f32.partialorder %v442, 0.0
      %vm539 = vcmp.ge.f32.partialorder %v445, 0.0
      %vm540 = vcmp.ge.f32.partialorder %v450, 0.0
      %vm541 = vcmp.ge.f32.partialorder %v453, 0.0
      %vm542 = vcmp.ge.f32.partialorder %v458, 0.0
      %vm543 = vcmp.ge.f32.partialorder %v461, 0.0
      %vm544 = vcmp.ge.f32.partialorder %v466, 0.0
      %vm545 = vcmp.ge.f32.partialorder %v469, 0.0
      %vm546 = vcmp.ge.f32.partialorder %v474, 0.0
      %vm547 = vcmp.ge.f32.partialorder %v477, 0.0
      %vm548 = vcmp.ge.f32.partialorder %v482, 0.0
      %vm549 = vcmp.ge.f32.partialorder %v485, 0.0
      %vm550 = vcmp.ge.f32.partialorder %v490, 0.0
      %vm551 = vcmp.ge.f32.partialorder %v493, 0.0
      %vm552 = vcmp.ge.f32.partialorder %v498, 0.0
      %vm553 = vcmp.ge.f32.partialorder %v501, 0.0
      %vm554 = vcmp.ge.f32.partialorder %v506, 0.0
      %vm555 = vcmp.ge.f32.partialorder %v509, 0.0
      %vm556 = vcmp.ge.f32.partialorder %v514, 0.0
      %vm557 = vcmp.ge.f32.partialorder %v517, 0.0
      %vm558 = vcmp.ge.f32.partialorder %v522, 0.0
      %vm559 = vcmp.ge.f32.partialorder %v525, 0.0
      %v560 = vmul.f32 %v402, 0.01
      %v561 = vmul.f32 %v405, 0.01
      %v562 = vmul.f32 %v410, 0.01
      %v563 = vmul.f32 %v413, 0.01
      %v564 = vmul.f32 %v418, 0.01
      %v565 = vmul.f32 %v421, 0.01
      %v566 = vmul.f32 %v426, 0.01
      %v567 = vmul.f32 %v429, 0.01
      %v568 = vmul.f32 %v434, 0.01
      %v569 = vmul.f32 %v437, 0.01
      %v570 = vmul.f32 %v442, 0.01
      %v571 = vmul.f32 %v445, 0.01
      %v572 = vmul.f32 %v450, 0.01
      %v573 = vmul.f32 %v453, 0.01
      %v574 = vmul.f32 %v458, 0.01
      %v575 = vmul.f32 %v461, 0.01
      %v576 = vmul.f32 %v466, 0.01
      %v577 = vmul.f32 %v469, 0.01
      %v578 = vmul.f32 %v474, 0.01
      %v579 = vmul.f32 %v477, 0.01
      %v580 = vmul.f32 %v482, 0.01
      %v581 = vmul.f32 %v485, 0.01
      %v582 = vmul.f32 %v490, 0.01
      %v583 = vmul.f32 %v493, 0.01
      %v584 = vmul.f32 %v498, 0.01
      %v585 = vmul.f32 %v501, 0.01
      %v586 = vmul.f32 %v506, 0.01
      %v587 = vmul.f32 %v509, 0.01
      %v588 = vmul.f32 %v514, 0.01
      %v589 = vmul.f32 %v517, 0.01
      %v590 = vmul.f32 %v522, 0.01
      %v591 = vmul.f32 %v525, 0.01
      %v592 = vsel %vm528, %v402, %v560
      %v593 = vsel %vm529, %v405, %v561
      %v594 = vsel %vm530, %v410, %v562
      %v595 = vsel %vm531, %v413, %v563
      %v596 = vsel %vm532, %v418, %v564
      %v597 = vsel %vm533, %v421, %v565
      %v598 = vsel %vm534, %v426, %v566
      %v599 = vsel %vm535, %v429, %v567
      %v600 = vsel %vm536, %v434, %v568
      %v601 = vsel %vm537, %v437, %v569
      %v602 = vsel %vm538, %v442, %v570
      %v603 = vsel %vm539, %v445, %v571
      %v604 = vsel %vm540, %v450, %v572
      %v605 = vsel %vm541, %v453, %v573
      %v606 = vsel %vm542, %v458, %v574
      %v607 = vsel %vm543, %v461, %v575
      %v608 = vsel %vm544, %v466, %v576
      %v609 = vsel %vm545, %v469, %v577
      %v610 = vsel %vm546, %v474, %v578
      %v611 = vsel %vm547, %v477, %v579
      %v612 = vsel %vm548, %v482, %v580
      %v613 = vsel %vm549, %v485, %v581
      %v614 = vsel %vm550, %v490, %v582
      %v615 = vsel %vm551, %v493, %v583
      %v616 = vsel %vm552, %v498, %v584
      %v617 = vsel %vm553, %v501, %v585
      %v618 = vsel %vm554, %v506, %v586
      %v619 = vsel %vm555, %v509, %v587
      %v620 = vsel %vm556, %v514, %v588
      %v621 = vsel %vm557, %v517, %v589
      %v622 = vsel %vm558, %v522, %v590
      %v623 = vsel %vm559, %v525, %v591
      %vm624 = vcmask 261120
      %625 = vst.msk [vmem:[%s172] sm:$0xff] %vm624, %v592
      %626 = vst.msk [vmem:[%s172 + $0x8] sm:$0xff] %vm624, %v593
      %627 = vst.msk [vmem:[%s172 + $0x10] sm:$0xff] %vm624, %v594
      %628 = vst.msk [vmem:[%s172 + $0x18] sm:$0xff] %vm624, %v595
      %629 = vst.msk [vmem:[%s172 + $0x20] sm:$0xff] %vm624, %v596
      %630 = vst.msk [vmem:[%s172 + $0x28] sm:$0xff] %vm624, %v597
      %631 = vst.msk [vmem:[%s172 + $0x30] sm:$0xff] %vm624, %v598
      %632 = vst.msk [vmem:[%s172 + $0x38] sm:$0xff] %vm624, %v599
      %633 = vst.msk [vmem:[%s172 + $0x40] sm:$0xff] %vm624, %v600
      %634 = vst.msk [vmem:[%s172 + $0x48] sm:$0xff] %vm624, %v601
      %635 = vst.msk [vmem:[%s172 + $0x50] sm:$0xff] %vm624, %v602
      %636 = vst.msk [vmem:[%s172 + $0x58] sm:$0xff] %vm624, %v603
      %637 = vst.msk [vmem:[%s172 + $0x60] sm:$0xff] %vm624, %v604
      %638 = vst.msk [vmem:[%s172 + $0x68] sm:$0xff] %vm624, %v605
      %639 = vst.msk [vmem:[%s172 + $0x70] sm:$0xff] %vm624, %v606
      %640 = vst.msk [vmem:[%s172 + $0x78] sm:$0xff] %vm624, %v607
      %641 = vst.msk [vmem:[%s172 + $0x80] sm:$0xff] %vm624, %v608
      %642 = vst.msk [vmem:[%s172 + $0x88] sm:$0xff] %vm624, %v609
      %643 = vst.msk [vmem:[%s172 + $0x90] sm:$0xff] %vm624, %v610
      %644 = vst.msk [vmem:[%s172 + $0x98] sm:$0xff] %vm624, %v611
      %645 = vst.msk [vmem:[%s172 + $0xa0] sm:$0xff] %vm624, %v612
      %646 = vst.msk [vmem:[%s172 + $0xa8] sm:$0xff] %vm624, %v613
      %647 = vst.msk [vmem:[%s172 + $0xb0] sm:$0xff] %vm624, %v614
      %648 = vst.msk [vmem:[%s172 + $0xb8] sm:$0xff] %vm624, %v615
      %649 = vst.msk [vmem:[%s172 + $0xc0] sm:$0xff] %vm624, %v616
      %650 = vst.msk [vmem:[%s172 + $0xc8] sm:$0xff] %vm624, %v617
      %651 = vst.msk [vmem:[%s172 + $0xd0] sm:$0xff] %vm624, %v618
      %652 = vst.msk [vmem:[%s172 + $0xd8] sm:$0xff] %vm624, %v619
      %653 = vst.msk [vmem:[%s172 + $0xe0] sm:$0xff] %vm624, %v620
      %654 = vst.msk [vmem:[%s172 + $0xe8] sm:$0xff] %vm624, %v621
      %655 = vst.msk [vmem:[%s172 + $0xf0] sm:$0xff] %vm624, %v622
      %656 = vst.msk [vmem:[%s172 + $0xf8] sm:$0xff] %vm624, %v623
      %s657 = smul.u32 32, %s14
      %p658 = scmp.lt.s32.totalorder %s657, 63
      %s659 = scalar_select %p658, %s657, 63
      %s660 = smul.addr %s659, 8
      %s661 = scalar_lea.vmem %s3, %s660
      // Predicated region
      $region33: #{tpu_custom_call.1} parent=31 // pred_check
        %p662 = pneg %p100
      $region34: #{tpu_custom_call.1} parent=31 // pred_check_branch
        %664 = sbr.rel (%p662) target = $region36
      $region35: #{tpu_custom_call.1} parent=31 // pred_region
        %s665 = smul.u32 32, %s14
      $region36: #{tpu_custom_call.1} parent=31 // pred_fallthru
        _
    $region32: #{tpu_custom_call.1} parent=5 // pred_fallthru
      _
    %p666 = scmp.le.s32.totalorder 2, %s9
    // Predicated region
    $region37: #{tpu_custom_call.1} parent=5 // pred_check
      %p667 = pneg %p666
    $region38: #{tpu_custom_call.1} parent=5 // pred_check_branch
      %669 = sbr.rel (%p667) target = $region40
    $region39: #{tpu_custom_call.1} parent=5 // pred_region
      %s670 = ssub.s32 %s9, 2
      // Predicated region
      $region41: #{tpu_custom_call.1} parent=39 // pred_check
        %p671 = pneg %p106
      $region42: #{tpu_custom_call.1} parent=39 // pred_check_branch
        %673 = sbr.rel (%p671) target = $region44
      $region43: #{tpu_custom_call.1} parent=39 // pred_region
        %s674 = smul.u32 32, %s15
        %p675 = scmp.lt.s32.totalorder %s674, 63
        %s676 = scalar_select %p675, %s674, 63
        %s677 = smul.addr %s676, 8
        %s678 = scalar_lea.vmem %s3, %s677
      $region44: #{tpu_custom_call.1} parent=39 // pred_fallthru
        _
    $region40: #{tpu_custom_call.1} parent=5 // pred_fallthru
      _
  $region6: #{tpu_custom_call.1} parent=0 // loop_footer
    %s13 = sadd.s32 1, %s9
  $region7: #{tpu_custom_call.1} parent=0 // loop_footer_branch
    %8 = sbr.rel target = $region3
  $region8: #{tpu_custom_call.1} parent=0 // loop_exit
    _

</llo_original>
